<compile_context>
chip_gen: v6e
topology: v6e:2x2x1
jax: 0.10.0
libtpu: 0.0.40
codegen_flags: <defaults>
</compile_context>

<pallas_src>
import jax
import jax.numpy as jnp
from jax import lax
from jax.experimental import pallas as pl
from jax.experimental.pallas import tpu as pltpu

# ---------------- model hyper-parameters (small, deterministic) ----------------
B = 2          # batch
N = 8          # nodes per graph
BN = B * N     # fused node dimension
F_IN = 16      # input node feature dim
H = 32         # GIN kernel_size (all three conv layers)
FC = 32        # fc_layers[0].out_size
OUT = 1        # discriminator out_dim
EPS = 0.0      # GIN epsilon

# Packed-parameter slab layout (rows; width = 32 lanes, f32)
W1_R = 0            # w1: (F_IN, H)   rows [0, 16)
W2_R = 16           # w2: (H, H)      rows [16, 48)
W3_R = 48           # w3: (H, H)      rows [48, 80)
WFC_R = 80          # wfc: (H, FC)    rows [80, 112)
WO_R = 112          # wo:  (FC, OUT)  rows [112, 144), only col 0 used
B_R = 144           # biases: b1,b2,b3,bfc,bo on rows 144..148
P_ROWS = 152        # padded to a multiple of 8 sublanes


def _disc_kernel(g_ref, x_ref, p_ref, out_ref, pre_ref):
    """Single invocation: all B graphs processed at once via block-diagonal adjacency."""
    g = g_ref[...]                                 # (BN, BN), includes (1+EPS)*I
    h = x_ref[...]                                 # (BN, F_IN)

    # static slices into the packed parameter slab (zero-cost views)
    w1 = p_ref[W1_R:W1_R + F_IN, :]                # (F_IN, H)
    w2 = p_ref[W2_R:W2_R + H, :]                   # (H, H)
    w3 = p_ref[W3_R:W3_R + H, :]                   # (H, H)
    wfc = p_ref[WFC_R:WFC_R + H, :]                # (H, FC)
    wo = p_ref[WO_R:WO_R + FC, :]                  # (FC, 32) -- only col 0 is the real head
    btile = p_ref[B_R:B_R + 8, :]                  # (8, 32): rows = b1,b2,b3,bfc,bo,pad

    def gin(h, w, b_row):
        # self-term already folded into g, so one MXU pass for aggregation
        agg = jnp.dot(g, h, preferred_element_type=jnp.float32)       # (BN, Fin)
        z = jnp.dot(agg, w, preferred_element_type=jnp.float32) + b_row
        return jnp.maximum(z, 0.0)

    # conv_before (2 GIN layers) + conv_after (1 GIN layer); hpool is pass-through
    h = gin(h, w1, btile[0:1, :])
    h = gin(h, w2, btile[1:2, :])
    h = gin(h, w3, btile[2:3, :])                  # (BN, H)

    # global sum pooling per graph as an indicator matmul on the MXU
    row = lax.broadcasted_iota(jnp.int32, (B, BN), 0)
    col = lax.broadcasted_iota(jnp.int32, (B, BN), 1)
    lo = row * N
    pool = jnp.logical_and(col >= lo, col < lo + N).astype(jnp.float32)   # (B, BN)
    pooled = jnp.dot(pool, h, preferred_element_type=jnp.float32)         # (B, H)

    # FC layer (Linear + ReLU) -> pre_output, batched over B
    fc = jnp.dot(pooled, wfc, preferred_element_type=jnp.float32) + btile[3:4, :]
    fc = jnp.maximum(fc, 0.0)                                              # (B, FC)

    # discriminator head: Linear(FC, 1) + Sigmoid (padded cols of wo / bo are zero)
    logits = jnp.dot(fc, wo, preferred_element_type=jnp.float32) + btile[4:5, :]
    out = jax.nn.sigmoid(logits[:, 0:OUT])                                 # (B, OUT)

    pre_ref[...] = fc.astype(pre_ref.dtype)
    out_ref[...] = out.astype(out_ref.dtype)


def pack_params(params):
    """Pack all weights / biases into a single lane-aligned f32 slab (one DMA)."""
    (w1, b1, w2, b2, w3, b3, wfc, bfc, wo, bo) = params
    slab = jnp.zeros((P_ROWS, H), jnp.float32)
    slab = slab.at[W1_R:W1_R + F_IN, :].set(w1)
    slab = slab.at[W2_R:W2_R + H, :].set(w2)
    slab = slab.at[W3_R:W3_R + H, :].set(w3)
    slab = slab.at[WFC_R:WFC_R + FC, :].set(wfc)
    slab = slab.at[WO_R:WO_R + FC, :OUT].set(wo)
    slab = slab.at[B_R + 0, :].set(b1)
    slab = slab.at[B_R + 1, :].set(b2)
    slab = slab.at[B_R + 2, :].set(b3)
    slab = slab.at[B_R + 3, :].set(bfc)
    slab = slab.at[B_R + 4, :OUT].set(bo)
    return slab


def discriminator_forward(G, x, params):
    """G: (B, N, N, 1) f32, x: (B, N, F_IN) f32 -> (sigmoid output (B, 1), pre_output (B, FC))."""
    Gs = jnp.squeeze(G, axis=-1)                       # nedges == 1 -> squeeze edge dim

    # Block-diagonal adjacency for the whole batch, GIN self-term folded in.
    g_bd = jnp.zeros((BN, BN), jnp.float32)
    for b in range(B):                                  # static B, tiny wrapper-side setup
        g_bd = g_bd.at[b * N:(b + 1) * N, b * N:(b + 1) * N].set(Gs[b])
    g_hat = g_bd + (1.0 + EPS) * jnp.eye(BN, dtype=jnp.float32)

    xf = x.reshape(BN, F_IN)
    slab = pack_params(params)

    out, pre = pl.pallas_call(
        _disc_kernel,
        out_shape=(jax.ShapeDtypeStruct((B, OUT), jnp.float32),
                   jax.ShapeDtypeStruct((B, FC), jnp.float32)),
        in_specs=[pl.BlockSpec(memory_space=pltpu.MemorySpace.VMEM)] * 3,
        out_specs=(pl.BlockSpec(memory_space=pltpu.MemorySpace.VMEM),
                   pl.BlockSpec(memory_space=pltpu.MemorySpace.VMEM)),
    )(g_hat, xf, slab)
    return out, pre


def discriminator_reference(G, x, params):
    """Pure-JAX reference mirroring the PyTorch forward semantics."""
    (w1, b1, w2, b2, w3, b3, wfc, bfc, wo, bo) = params
    g = jnp.squeeze(G, axis=-1)
    h = x

    def gin(h, w, b):
        agg = jnp.einsum("bij,bjf->bif", g, h)
        z = agg + (1.0 + EPS) * h
        return jax.nn.relu(jnp.einsum("bnf,fk->bnk", z, w) + b)

    h = gin(h, w1, b1)
    h = gin(h, w2, b2)
    h = gin(h, w3, b3)
    pooled = jnp.sum(h, axis=1)                        # (B, H)  global sum pool
    pre = jax.nn.relu(pooled @ wfc + bfc)              # (B, FC) pre_output
    out = jax.nn.sigmoid(pre @ wo + bo)                # (B, 1)
    return out, pre


def make_params(key):
    ks = jax.random.split(key, 5)

    def lin(k, fin, fout):
        scale = 1.0 / jnp.sqrt(jnp.float32(fin))
        kw, kb = jax.random.split(k)
        w = jax.random.uniform(kw, (fin, fout), jnp.float32, -scale, scale)
        b = jax.random.uniform(kb, (fout,), jnp.float32, -scale, scale)
        return w, b

    w1, b1 = lin(ks[0], F_IN, H)
    w2, b2 = lin(ks[1], H, H)
    w3, b3 = lin(ks[2], H, H)
    wfc, bfc = lin(ks[3], H, FC)
    wo, bo = lin(ks[4], FC, OUT)
    return (w1, b1, w2, b2, w3, b3, wfc, bfc, wo, bo)


if __name__ == "__main__":
    key = jax.random.PRNGKey(0)
    kg, kx, kp = jax.random.split(key, 3)

    # symmetric 0/1 adjacency with self-loops, trailing singleton edge dim (nedges == 1)
    A = (jax.random.uniform(kg, (B, N, N)) > 0.5).astype(jnp.float32)
    A = jnp.maximum(A, jnp.swapaxes(A, 1, 2))
    A = jnp.maximum(A, jnp.eye(N, dtype=jnp.float32)[None])
    G = A[..., None]                                   # (B, N, N, 1)
    x = jax.random.normal(kx, (B, N, F_IN), jnp.float32)

    params = make_params(kp)

    out, pre = discriminator_forward(G, x, params)
    out = jax.block_until_ready(out)

    ref_out, ref_pre = discriminator_reference(G, x, params)
    assert out.shape == (B, OUT) and pre.shape == (B, FC)
    assert jnp.allclose(out, ref_out, atol=1e-4, rtol=1e-4), "output mismatch vs reference"
    assert jnp.allclose(pre, ref_pre, atol=1e-4, rtol=1e-4), "pre_output mismatch vs reference"

    # TODO(synk): embedding-layer / EdgeGraphLayer / hierarchical-pooling branches of the
    # Encoder are not exercised in this config (embed_dim unset, nedges=1, hpool=None).

    print("KERNEL_OK")
</pallas_src>

<mosaic_0001>
module attributes {stable_mosaic.version = 11 : i64} {
  func.func @_disc_kernel(%arg0: memref<16x16xf32, #tpu.memory_space<vmem>>, %arg1: memref<16x16xf32, #tpu.memory_space<vmem>>, %arg2: memref<152x32xf32, #tpu.memory_space<vmem>>, %arg3: memref<2x1xf32, #tpu.memory_space<vmem>>, %arg4: memref<2x32xf32, #tpu.memory_space<vmem>>) attributes {dimension_semantics = [], scalar_prefetch = 0 : i64, scratch_operands = 0 : i64, tpu.core_type = #tpu.core_type<tc>} {
    %c0 = arith.constant 0 : index
    %c0_0 = arith.constant 0 : index
    %0 = vector.load %arg0[%c0, %c0_0] : memref<16x16xf32, #tpu.memory_space<vmem>>, vector<16x16xf32>
    %c0_1 = arith.constant 0 : index
    %c0_2 = arith.constant 0 : index
    %1 = vector.load %arg1[%c0_1, %c0_2] : memref<16x16xf32, #tpu.memory_space<vmem>>, vector<16x16xf32>
    %c0_3 = arith.constant 0 : index
    %c0_4 = arith.constant 0 : index
    %2 = vector.load %arg2[%c0_3, %c0_4] : memref<152x32xf32, #tpu.memory_space<vmem>>, vector<16x32xf32>
    %c16 = arith.constant 16 : index
    %c0_5 = arith.constant 0 : index
    %3 = vector.load %arg2[%c16, %c0_5] : memref<152x32xf32, #tpu.memory_space<vmem>>, vector<32x32xf32>
    %c48 = arith.constant 48 : index
    %c0_6 = arith.constant 0 : index
    %4 = vector.load %arg2[%c48, %c0_6] : memref<152x32xf32, #tpu.memory_space<vmem>>, vector<32x32xf32>
    %c80 = arith.constant 80 : index
    %c0_7 = arith.constant 0 : index
    %5 = vector.load %arg2[%c80, %c0_7] : memref<152x32xf32, #tpu.memory_space<vmem>>, vector<32x32xf32>
    %c112 = arith.constant 112 : index
    %c0_8 = arith.constant 0 : index
    %6 = vector.load %arg2[%c112, %c0_8] : memref<152x32xf32, #tpu.memory_space<vmem>>, vector<32x32xf32>
    %c144 = arith.constant 144 : index
    %c0_9 = arith.constant 0 : index
    %7 = vector.load %arg2[%c144, %c0_9] : memref<152x32xf32, #tpu.memory_space<vmem>>, vector<8x32xf32>
    %8 = vector.extract_strided_slice %7 {offsets = [0, 0], sizes = [1, 32], strides = [1, 1]} : vector<8x32xf32> to vector<1x32xf32>
    %cst = arith.constant dense<0.000000e+00> : vector<16x16xf32>
    %9 = tpu.matmul %0, %1, %cst {dimension_numbers = #tpu.dot_dimension_numbers<[1], [0], [0], [1], [0, 0, 1, 1], [], []>} : vector<16x16xf32>, vector<16x16xf32>, vector<16x16xf32> -> vector<16x16xf32>
    %cst_10 = arith.constant dense<0.000000e+00> : vector<16x32xf32>
    %10 = tpu.matmul %9, %2, %cst_10 {dimension_numbers = #tpu.dot_dimension_numbers<[1], [0], [0], [1], [0, 0, 1, 1], [], []>} : vector<16x16xf32>, vector<16x32xf32>, vector<16x32xf32> -> vector<16x32xf32>
    %11 = vector.broadcast %8 : vector<1x32xf32> to vector<16x32xf32>
    %12 = arith.addf %10, %11 : vector<16x32xf32>
    %cst_11 = arith.constant 0.000000e+00 : f32
    %13 = vector.broadcast %cst_11 : f32 to vector<16x32xf32>
    %14 = arith.maximumf %12, %13 : vector<16x32xf32>
    %15 = vector.extract_strided_slice %7 {offsets = [1, 0], sizes = [1, 32], strides = [1, 1]} : vector<8x32xf32> to vector<1x32xf32>
    %cst_12 = arith.constant dense<0.000000e+00> : vector<16x32xf32>
    %16 = tpu.matmul %0, %14, %cst_12 {dimension_numbers = #tpu.dot_dimension_numbers<[1], [0], [0], [1], [0, 0, 1, 1], [], []>} : vector<16x16xf32>, vector<16x32xf32>, vector<16x32xf32> -> vector<16x32xf32>
    %cst_13 = arith.constant dense<0.000000e+00> : vector<16x32xf32>
    %17 = tpu.matmul %16, %3, %cst_13 {dimension_numbers = #tpu.dot_dimension_numbers<[1], [0], [0], [1], [0, 0, 1, 1], [], []>} : vector<16x32xf32>, vector<32x32xf32>, vector<16x32xf32> -> vector<16x32xf32>
    %18 = vector.broadcast %15 : vector<1x32xf32> to vector<16x32xf32>
    %19 = arith.addf %17, %18 : vector<16x32xf32>
    %cst_14 = arith.constant 0.000000e+00 : f32
    %20 = vector.broadcast %cst_14 : f32 to vector<16x32xf32>
    %21 = arith.maximumf %19, %20 : vector<16x32xf32>
    %22 = vector.extract_strided_slice %7 {offsets = [2, 0], sizes = [1, 32], strides = [1, 1]} : vector<8x32xf32> to vector<1x32xf32>
    %cst_15 = arith.constant dense<0.000000e+00> : vector<16x32xf32>
    %23 = tpu.matmul %0, %21, %cst_15 {dimension_numbers = #tpu.dot_dimension_numbers<[1], [0], [0], [1], [0, 0, 1, 1], [], []>} : vector<16x16xf32>, vector<16x32xf32>, vector<16x32xf32> -> vector<16x32xf32>
    %cst_16 = arith.constant dense<0.000000e+00> : vector<16x32xf32>
    %24 = tpu.matmul %23, %4, %cst_16 {dimension_numbers = #tpu.dot_dimension_numbers<[1], [0], [0], [1], [0, 0, 1, 1], [], []>} : vector<16x32xf32>, vector<32x32xf32>, vector<16x32xf32> -> vector<16x32xf32>
    %25 = vector.broadcast %22 : vector<1x32xf32> to vector<16x32xf32>
    %26 = arith.addf %24, %25 : vector<16x32xf32>
    %cst_17 = arith.constant 0.000000e+00 : f32
    %27 = vector.broadcast %cst_17 : f32 to vector<16x32xf32>
    %28 = arith.maximumf %26, %27 : vector<16x32xf32>
    %29 = tpu.iota {dimensions = array<i32: 0>} : vector<2x16xi32>
    %30 = tpu.iota {dimensions = array<i32: 1>} : vector<2x16xi32>
    %c8_i32 = arith.constant 8 : i32
    %31 = vector.broadcast %c8_i32 : i32 to vector<2x16xi32>
    %32 = arith.muli %29, %31 : vector<2x16xi32>
    %33 = arith.cmpi sge, %30, %32 : vector<2x16xi32>
    %c8_i32_18 = arith.constant 8 : i32
    %34 = vector.broadcast %c8_i32_18 : i32 to vector<2x16xi32>
    %35 = arith.addi %32, %34 : vector<2x16xi32>
    %36 = arith.cmpi slt, %30, %35 : vector<2x16xi32>
    %37 = arith.andi %33, %36 : vector<2x16xi1>
    %38 = arith.extui %37 : vector<2x16xi1> to vector<2x16xi32>
    %39 = arith.sitofp %38 : vector<2x16xi32> to vector<2x16xf32>
    %cst_19 = arith.constant dense<0.000000e+00> : vector<2x32xf32>
    %40 = tpu.matmul %39, %28, %cst_19 {dimension_numbers = #tpu.dot_dimension_numbers<[1], [0], [0], [1], [0, 0, 1, 1], [], []>} : vector<2x16xf32>, vector<16x32xf32>, vector<2x32xf32> -> vector<2x32xf32>
    %cst_20 = arith.constant dense<0.000000e+00> : vector<2x32xf32>
    %41 = tpu.matmul %40, %5, %cst_20 {dimension_numbers = #tpu.dot_dimension_numbers<[1], [0], [0], [1], [0, 0, 1, 1], [], []>} : vector<2x32xf32>, vector<32x32xf32>, vector<2x32xf32> -> vector<2x32xf32>
    %42 = vector.extract_strided_slice %7 {offsets = [3, 0], sizes = [1, 32], strides = [1, 1]} : vector<8x32xf32> to vector<1x32xf32>
    %43 = vector.broadcast %42 : vector<1x32xf32> to vector<2x32xf32>
    %44 = arith.addf %41, %43 : vector<2x32xf32>
    %cst_21 = arith.constant 0.000000e+00 : f32
    %45 = vector.broadcast %cst_21 : f32 to vector<2x32xf32>
    %46 = arith.maximumf %44, %45 : vector<2x32xf32>
    %cst_22 = arith.constant dense<0.000000e+00> : vector<2x32xf32>
    %47 = tpu.matmul %46, %6, %cst_22 {dimension_numbers = #tpu.dot_dimension_numbers<[1], [0], [0], [1], [0, 0, 1, 1], [], []>} : vector<2x32xf32>, vector<32x32xf32>, vector<2x32xf32> -> vector<2x32xf32>
    %48 = vector.extract_strided_slice %7 {offsets = [4, 0], sizes = [1, 32], strides = [1, 1]} : vector<8x32xf32> to vector<1x32xf32>
    %49 = vector.broadcast %48 : vector<1x32xf32> to vector<2x32xf32>
    %50 = arith.addf %47, %49 : vector<2x32xf32>
    %51 = vector.extract_strided_slice %50 {offsets = [0, 0], sizes = [2, 1], strides = [1, 1]} : vector<2x32xf32> to vector<2x1xf32>
    %52 = arith.negf %51 : vector<2x1xf32>
    %53 = math.exp %52 : vector<2x1xf32>
    %cst_23 = arith.constant 1.000000e+00 : f32
    %54 = vector.broadcast %cst_23 : f32 to vector<2x1xf32>
    %55 = arith.addf %54, %53 : vector<2x1xf32>
    %56 = arith.divf %54, %55 : vector<2x1xf32>
    %c0_24 = arith.constant 0 : index
    %c0_25 = arith.constant 0 : index
    %57 = vector.load %arg4[%c0_24, %c0_25] : memref<2x32xf32, #tpu.memory_space<vmem>>, vector<2x32xf32>
    tpu.vector_store %arg4[%c0_24, %c0_25], %46 {strides = array<i32>} : memref<2x32xf32, #tpu.memory_space<vmem>>, vector<2x32xf32>,
    %c0_26 = arith.constant 0 : index
    %c0_27 = arith.constant 0 : index
    %58 = vector.load %arg3[%c0_26, %c0_27] : memref<2x1xf32, #tpu.memory_space<vmem>>, vector<2x1xf32>
    tpu.vector_store %arg3[%c0_26, %c0_27], %56 {strides = array<i32>} : memref<2x1xf32, #tpu.memory_space<vmem>>, vector<2x1xf32>,
    return
  }
}

</mosaic_0001>

<llo_original>
// kernel: tpu_custom_call.1
$region0: #{tpu_custom_call.1}
  #allocation0 [shape = 'u32[]', space=smem, size = 0x4, offset = 0x4, fixed_abs, tag = 'smem constant byte address 0x4 - core index']
  #allocation1 [shape = 'u32[144,128]{1,0:T(1,128)}', space=vmem, size = 0x12000, scoped, tag = 'internal scratch']
  %s0 = inlined_call_operand.vmem [shape: f32[16,16], index: 0, kind: input, shape index: {}]
  %s1 = inlined_call_operand.vmem [shape: f32[16,16], index: 1, kind: input, shape index: {}]
  %s2 = inlined_call_operand.vmem [shape: f32[152,32], index: 2, kind: input, shape index: {}]
  %s3 = inlined_call_operand.vmem [shape: f32[2,1], index: 3, kind: output, shape index: {0}]
  %s4 = inlined_call_operand.hbm [shape: f32[2,32], index: 4, kind: output, shape index: {1}]
  %5 = xla_tuple %s3, %s4
  %s6 = sld [smem:[#allocation0]]
  $region30: #{tpu_custom_call.1} parent=0
    _
  %s8 = ssub.s32 1, %s6
  %s9 = scalar_select 0, %s8, %s6
  $region1: #{tpu_custom_call.1} parent=0
    #allocation2 [shape = 'u8[1024]{0}', space=vmem, size = 0x400, scoped, tag = 'output window, operand 1, single buffered']
    #allocation3 [shape = 's32[1]{0}', space=sflag, size = 0x4, scoped, tag = 'scoped memory for tpu_custom_call.1']
    %10 = vsyncpa [#allocation3], 0
    // Predicated region
    $region2: #{tpu_custom_call.1} parent=1 // pred_check
      _
    $region3: #{tpu_custom_call.1} parent=1 // pred_check_branch
      %12 = sbr.rel (0) target = $region5
    $region4: #{tpu_custom_call.1} parent=1 // pred_region
      _
    $region5: #{tpu_custom_call.1} parent=1 // pred_fallthru
      _
    // Predicated region
    $region6: #{tpu_custom_call.1} parent=1 // pred_check
      _
    $region7: #{tpu_custom_call.1} parent=1 // pred_check_branch
      %14 = sbr.rel (0) target = $region9
    $region8: #{tpu_custom_call.1} parent=1 // pred_region
      _
    $region9: #{tpu_custom_call.1} parent=1 // pred_fallthru
      _
    // Predicated region
    $region10: #{tpu_custom_call.1} parent=1 // pred_check
      _
    $region11: #{tpu_custom_call.1} parent=1 // pred_check_branch
      %16 = sbr.rel (0) target = $region13
    $region12: #{tpu_custom_call.1} parent=1 // pred_region
      _
    $region13: #{tpu_custom_call.1} parent=1 // pred_fallthru
      _
    %v17 = vld [vmem:[%s0] sm:$0xff]
    %v18 = vld [vmem:[%s0 + $0x8] sm:$0xff]
    %v19 = vld [vmem:[%s1] sm:$0xff]
    %v20 = vld [vmem:[%s1 + $0x8] sm:$0xff]
    %v21 = vld [vmem:[%s2] sm:$0xff]
    %v22 = vld [vmem:[%s2 + $0x8] sm:$0xff]
    %v23 = vld [vmem:[%s2 + $0x10] sm:$0xff]
    %v24 = vld [vmem:[%s2 + $0x18] sm:$0xff]
    %v25 = vld [vmem:[%s2 + $0x20] sm:$0xff]
    %v26 = vld [vmem:[%s2 + $0x28] sm:$0xff]
    %v27 = vld [vmem:[%s2 + $0x30] sm:$0xff]
    %v28 = vld [vmem:[%s2 + $0x38] sm:$0xff]
    %v29 = vld [vmem:[%s2 + $0x40] sm:$0xff]
    %v30 = vld [vmem:[%s2 + $0x48] sm:$0xff]
    %v31 = vld [vmem:[%s2 + $0x50] sm:$0xff]
    %v32 = vld [vmem:[%s2 + $0x58] sm:$0xff]
    %v33 = vld [vmem:[%s2 + $0x60] sm:$0xff]
    %v34 = vld [vmem:[%s2 + $0x68] sm:$0xff]
    %v35 = vld [vmem:[%s2 + $0x70] sm:$0xff]
    %v36 = vld [vmem:[%s2 + $0x78] sm:$0xff]
    %v37 = vld [vmem:[%s2 + $0x80] sm:$0xff]
    %v38 = vld [vmem:[%s2 + $0x88] sm:$0xff]
    %v39 = vld [vmem:[%s2 + $0x90] sm:$0xff]
    %vm40 = vcmask 130048
    %v42 = vsel %vm40, %v17, 0
    %v45 = vsel %vm40, %v18, 0
    %47 = vmatprep.subr.mxu0 0.0
    %48 = vmatpush1.msra.mxu0 0.0
    %49 = vmatprep.subr.mxu0 0.0
    %50 = vmatpush1.msra.mxu0 0.0
    %51 = vmatprep.subr.mxu0 0.0
    %52 = vmatpush1.msra.mxu0 0.0
    %53 = vmatprep.subr.mxu0 0.0
    %54 = vmatpush1.msra.mxu0 0.0
    %55 = vmatprep.subr.mxu0 0.0
    %56 = vmatpush1.msra.mxu0 0.0
    %57 = vmatprep.subr.mxu0 0.0
    %58 = vmatpush1.msra.mxu0 0.0
    %59 = vmatprep.subr.mxu0 0.0
    %60 = vmatpush1.msra.mxu0 0.0
    %61 = vmatprep.subr.mxu0 0.0
    %62 = vmatpush1.msra.mxu0 0.0
    %63 = vmatprep.subr.mxu0 0.0
    %64 = vmatpush1.msra.mxu0 0.0
    %65 = vmatprep.subr.mxu0 0.0
    %66 = vmatpush1.msra.mxu0 0.0
    %67 = vmatprep.subr.mxu0 0.0
    %68 = vmatpush1.msra.mxu0 0.0
    %69 = vmatprep.subr.mxu0 0.0
    %70 = vmatpush1.msra.mxu0 0.0
    %71 = vmatprep.subr.mxu0 0.0
    %72 = vmatpush1.msra.mxu0 0.0
    %73 = vmatprep.subr.mxu0 0.0
    %74 = vmatpush1.msra.mxu0 0.0
    %75 = vmatprep.subr.mxu0 0.0
    %76 = vmatpush1.msra.mxu0 %v20
    %77 = vmatprep.subr.mxu0 0.0
    %78 = vmatpush1.msra.mxu0 %v19
    %79 = vmatprep.subr.mxu0 0.0
    %80 = vmatpush2.msra.mxu0 0.0
    %81 = vmatprep.subr.mxu0 0.0
    %82 = vmatpush2.msra.mxu0 0.0
    %83 = vmatprep.subr.mxu0 0.0
    %84 = vmatpush2.msra.mxu0 0.0
    %85 = vmatprep.subr.mxu0 0.0
    %86 = vmatpush2.msra.mxu0 0.0
    %87 = vmatprep.subr.mxu0 0.0
    %88 = vmatpush2.msra.mxu0 0.0
    %89 = vmatprep.subr.mxu0 0.0
    %90 = vmatpush2.msra.mxu0 0.0
    %91 = vmatprep.subr.mxu0 0.0
    %92 = vmatpush2.msra.mxu0 0.0
    %93 = vmatprep.subr.mxu0 0.0
    %94 = vmatpush2.msra.mxu0 0.0
    %95 = vmatprep.subr.mxu0 0.0
    %96 = vmatpush2.msra.mxu0 0.0
    %97 = vmatprep.subr.mxu0 0.0
    %98 = vmatpush2.msra.mxu0 0.0
    %99 = vmatprep.subr.mxu0 0.0
    %100 = vmatpush2.msra.mxu0 0.0
    %101 = vmatprep.subr.mxu0 0.0
    %102 = vmatpush2.msra.mxu0 0.0
    %103 = vmatprep.subr.mxu0 0.0
    %104 = vmatpush2.msra.mxu0 0.0
    %105 = vmatprep.subr.mxu0 0.0
    %106 = vmatpush2.msra.mxu0 0.0
    %107 = vmatprep.subr.mxu0 0.0
    %108 = vmatpush2.msra.mxu0 0.0
    %109 = vmatprep.subr.mxu0 0.0
    %110 = vmatpush2.msra.mxu0 0.0
    %111 = vmatprep.mubr.f32.mxu0 0.0
    %112 = vmatmul.mubr.f32.gmra.mxu0 %v42
    %v113 = vpop.f32.mrf.mxu0
    %v114 = vadd.f32 0.0, %v113
    %v115 = vpop.f32.mrf.mxu0
    %116 = vmatprep.mubr.f32.mxu0 0.0
    %117 = vmatmul.mubr.f32.gmra.mxu0 %v45
    %v118 = vpop.f32.mrf.mxu0
    %v119 = vadd.f32 0.0, %v118
    %v120 = vpop.f32.mrf.mxu0
    %121 = vdwg.mxu0
    %v122 = vlaneseq
    %v123 = vshrl.u32 %v122, 7
    %v124 = vsub.s32 0, %v123
    %v125 = vrot.slane %v39, %v124
    %v127 = vsel %vm40, %v114, 0
    %v130 = vsel %vm40, %v119, 0
    %132 = vmatprep.subr.mxu0 0.0
    %133 = vmatpush1.msra.mxu0 0.0
    %134 = vmatprep.subr.mxu0 0.0
    %135 = vmatpush1.msra.mxu0 0.0
    %136 = vmatprep.subr.mxu0 0.0
    %137 = vmatpush1.msra.mxu0 0.0
    %138 = vmatprep.subr.mxu0 0.0
    %139 = vmatpush1.msra.mxu0 0.0
    %140 = vmatprep.subr.mxu0 0.0
    %141 = vmatpush1.msra.mxu0 0.0
    %142 = vmatprep.subr.mxu0 0.0
    %143 = vmatpush1.msra.mxu0 0.0
    %144 = vmatprep.subr.mxu0 0.0
    %145 = vmatpush1.msra.mxu0 0.0
    %146 = vmatprep.subr.mxu0 0.0
    %147 = vmatpush1.msra.mxu0 0.0
    %148 = vmatprep.subr.mxu0 0.0
    %149 = vmatpush1.msra.mxu0 0.0
    %150 = vmatprep.subr.mxu0 0.0
    %151 = vmatpush1.msra.mxu0 0.0
    %152 = vmatprep.subr.mxu0 0.0
    %153 = vmatpush1.msra.mxu0 0.0
    %154 = vmatprep.subr.mxu0 0.0
    %155 = vmatpush1.msra.mxu0 0.0
    %156 = vmatprep.subr.mxu0 0.0
    %157 = vmatpush1.msra.mxu0 0.0
    %158 = vmatprep.subr.mxu0 0.0
    %159 = vmatpush1.msra.mxu0 0.0
    %160 = vmatprep.subr.mxu0 0.0
    %161 = vmatpush1.msra.mxu0 %v22
    %162 = vmatprep.subr.mxu0 0.0
    %163 = vmatpush1.msra.mxu0 %v21
    %164 = vmatprep.subr.mxu0 0.0
    %165 = vmatpush2.msra.mxu0 0.0
    %166 = vmatprep.subr.mxu0 0.0
    %167 = vmatpush2.msra.mxu0 0.0
    %168 = vmatprep.subr.mxu0 0.0
    %169 = vmatpush2.msra.mxu0 0.0
    %170 = vmatprep.subr.mxu0 0.0
    %171 = vmatpush2.msra.mxu0 0.0
    %172 = vmatprep.subr.mxu0 0.0
    %173 = vmatpush2.msra.mxu0 0.0
    %174 = vmatprep.subr.mxu0 0.0
    %175 = vmatpush2.msra.mxu0 0.0
    %176 = vmatprep.subr.mxu0 0.0
    %177 = vmatpush2.msra.mxu0 0.0
    %178 = vmatprep.subr.mxu0 0.0
    %179 = vmatpush2.msra.mxu0 0.0
    %180 = vmatprep.subr.mxu0 0.0
    %181 = vmatpush2.msra.mxu0 0.0
    %182 = vmatprep.subr.mxu0 0.0
    %183 = vmatpush2.msra.mxu0 0.0
    %184 = vmatprep.subr.mxu0 0.0
    %185 = vmatpush2.msra.mxu0 0.0
    %186 = vmatprep.subr.mxu0 0.0
    %187 = vmatpush2.msra.mxu0 0.0
    %188 = vmatprep.subr.mxu0 0.0
    %189 = vmatpush2.msra.mxu0 0.0
    %190 = vmatprep.subr.mxu0 0.0
    %191 = vmatpush2.msra.mxu0 0.0
    %192 = vmatprep.subr.mxu0 0.0
    %193 = vmatpush2.msra.mxu0 0.0
    %194 = vmatprep.subr.mxu0 0.0
    %195 = vmatpush2.msra.mxu0 0.0
    %196 = vmatprep.mubr.f32.mxu0 0.0
    %197 = vmatmul.mubr.f32.gmra.mxu0 %v127
    %v198 = vpop.f32.mrf.mxu0
    %v199 = vadd.f32 %v125, %v198
    %v200 = vpop.f32.mrf.mxu0
    %201 = vmatprep.mubr.f32.mxu0 0.0
    %202 = vmatmul.mubr.f32.gmra.mxu0 %v130
    %v203 = vpop.f32.mrf.mxu0
    %v204 = vadd.f32 %v125, %v203
    %v205 = vpop.f32.mrf.mxu0
    %206 = vdwg.mxu0
    %v207 = vmax.f32 %v199, 0.0
    %v208 = vmax.f32 %v204, 0.0
    %209 = vmatprep.subr.mxu0 0.0
    %210 = vmatpush1.msra.mxu0 0.0
    %211 = vmatprep.subr.mxu0 0.0
    %212 = vmatpush1.msra.mxu0 0.0
    %213 = vmatprep.subr.mxu0 0.0
    %214 = vmatpush1.msra.mxu0 0.0
    %215 = vmatprep.subr.mxu0 0.0
    %216 = vmatpush1.msra.mxu0 0.0
    %217 = vmatprep.subr.mxu0 0.0
    %218 = vmatpush1.msra.mxu0 0.0
    %219 = vmatprep.subr.mxu0 0.0
    %220 = vmatpush1.msra.mxu0 0.0
    %221 = vmatprep.subr.mxu0 0.0
    %222 = vmatpush1.msra.mxu0 0.0
    %223 = vmatprep.subr.mxu0 0.0
    %224 = vmatpush1.msra.mxu0 0.0
    %225 = vmatprep.subr.mxu0 0.0
    %226 = vmatpush1.msra.mxu0 0.0
    %227 = vmatprep.subr.mxu0 0.0
    %228 = vmatpush1.msra.mxu0 0.0
    %229 = vmatprep.subr.mxu0 0.0
    %230 = vmatpush1.msra.mxu0 0.0
    %231 = vmatprep.subr.mxu0 0.0
    %232 = vmatpush1.msra.mxu0 0.0
    %233 = vmatprep.subr.mxu0 0.0
    %234 = vmatpush1.msra.mxu0 0.0
    %235 = vmatprep.subr.mxu0 0.0
    %236 = vmatpush1.msra.mxu0 0.0
    %237 = vmatprep.subr.mxu0 0.0
    %238 = vmatpush1.msra.mxu0 %v208
    %239 = vmatprep.subr.mxu0 0.0
    %240 = vmatpush1.msra.mxu0 %v207
    %241 = vmatprep.subr.mxu0 0.0
    %242 = vmatpush2.msra.mxu0 0.0
    %243 = vmatprep.subr.mxu0 0.0
    %244 = vmatpush2.msra.mxu0 0.0
    %245 = vmatprep.subr.mxu0 0.0
    %246 = vmatpush2.msra.mxu0 0.0
    %247 = vmatprep.subr.mxu0 0.0
    %248 = vmatpush2.msra.mxu0 0.0
    %249 = vmatprep.subr.mxu0 0.0
    %250 = vmatpush2.msra.mxu0 0.0
    %251 = vmatprep.subr.mxu0 0.0
    %252 = vmatpush2.msra.mxu0 0.0
    %253 = vmatprep.subr.mxu0 0.0
    %254 = vmatpush2.msra.mxu0 0.0
    %255 = vmatprep.subr.mxu0 0.0
    %256 = vmatpush2.msra.mxu0 0.0
    %257 = vmatprep.subr.mxu0 0.0
    %258 = vmatpush2.msra.mxu0 0.0
    %259 = vmatprep.subr.mxu0 0.0
    %260 = vmatpush2.msra.mxu0 0.0
    %261 = vmatprep.subr.mxu0 0.0
    %262 = vmatpush2.msra.mxu0 0.0
    %263 = vmatprep.subr.mxu0 0.0
    %264 = vmatpush2.msra.mxu0 0.0
    %265 = vmatprep.subr.mxu0 0.0
    %266 = vmatpush2.msra.mxu0 0.0
    %267 = vmatprep.subr.mxu0 0.0
    %268 = vmatpush2.msra.mxu0 0.0
    %269 = vmatprep.subr.mxu0 0.0
    %270 = vmatpush2.msra.mxu0 0.0
    %271 = vmatprep.subr.mxu0 0.0
    %272 = vmatpush2.msra.mxu0 0.0
    %273 = vmatprep.mubr.f32.mxu0 0.0
    %274 = vmatmul.mubr.f32.gmra.mxu0 %v42
    %v275 = vpop.f32.mrf.mxu0
    %v276 = vadd.f32 0.0, %v275
    %v277 = vpop.f32.mrf.mxu0
    %278 = vmatprep.mubr.f32.mxu0 0.0
    %279 = vmatmul.mubr.f32.gmra.mxu0 %v45
    %v280 = vpop.f32.mrf.mxu0
    %v281 = vadd.f32 0.0, %v280
    %v282 = vpop.f32.mrf.mxu0
    %283 = vdwg.mxu0
    %v284 = vlaneseq
    %v285 = vshrl.u32 %v284, 7
    %v286 = vsub.s32 1, %v285
    %v287 = vrot.slane %v39, %v286
    %vm288 = vcmask 261120
    %v290 = vsel %vm288, %v276, 0
    %v293 = vsel %vm288, %v281, 0
    %295 = vmatprep.subr.mxu0 0.0
    %296 = vmatpush1.msra.mxu0 0.0
    %297 = vmatprep.subr.mxu0 0.0
    %298 = vmatpush1.msra.mxu0 0.0
    %299 = vmatprep.subr.mxu0 0.0
    %300 = vmatpush1.msra.mxu0 0.0
    %301 = vmatprep.subr.mxu0 0.0
    %302 = vmatpush1.msra.mxu0 0.0
    %303 = vmatprep.subr.mxu0 0.0
    %304 = vmatpush1.msra.mxu0 0.0
    %305 = vmatprep.subr.mxu0 0.0
    %306 = vmatpush1.msra.mxu0 0.0
    %307 = vmatprep.subr.mxu0 0.0
    %308 = vmatpush1.msra.mxu0 0.0
    %309 = vmatprep.subr.mxu0 0.0
    %310 = vmatpush1.msra.mxu0 0.0
    %311 = vmatprep.subr.mxu0 0.0
    %312 = vmatpush1.msra.mxu0 0.0
    %313 = vmatprep.subr.mxu0 0.0
    %314 = vmatpush1.msra.mxu0 0.0
    %315 = vmatprep.subr.mxu0 0.0
    %316 = vmatpush1.msra.mxu0 0.0
    %317 = vmatprep.subr.mxu0 0.0
    %318 = vmatpush1.msra.mxu0 0.0
    %319 = vmatprep.subr.mxu0 0.0
    %320 = vmatpush1.msra.mxu0 %v26
    %321 = vmatprep.subr.mxu0 0.0
    %322 = vmatpush1.msra.mxu0 %v25
    %323 = vmatprep.subr.mxu0 0.0
    %324 = vmatpush1.msra.mxu0 %v24
    %325 = vmatprep.subr.mxu0 0.0
    %326 = vmatpush1.msra.mxu0 %v23
    %327 = vmatprep.subr.mxu0 0.0
    %328 = vmatpush2.msra.mxu0 0.0
    %329 = vmatprep.subr.mxu0 0.0
    %330 = vmatpush2.msra.mxu0 0.0
    %331 = vmatprep.subr.mxu0 0.0
    %332 = vmatpush2.msra.mxu0 0.0
    %333 = vmatprep.subr.mxu0 0.0
    %334 = vmatpush2.msra.mxu0 0.0
    %335 = vmatprep.subr.mxu0 0.0
    %336 = vmatpush2.msra.mxu0 0.0
    %337 = vmatprep.subr.mxu0 0.0
    %338 = vmatpush2.msra.mxu0 0.0
    %339 = vmatprep.subr.mxu0 0.0
    %340 = vmatpush2.msra.mxu0 0.0
    %341 = vmatprep.subr.mxu0 0.0
    %342 = vmatpush2.msra.mxu0 0.0
    %343 = vmatprep.subr.mxu0 0.0
    %344 = vmatpush2.msra.mxu0 0.0
    %345 = vmatprep.subr.mxu0 0.0
    %346 = vmatpush2.msra.mxu0 0.0
    %347 = vmatprep.subr.mxu0 0.0
    %348 = vmatpush2.msra.mxu0 0.0
    %349 = vmatprep.subr.mxu0 0.0
    %350 = vmatpush2.msra.mxu0 0.0
    %351 = vmatprep.subr.mxu0 0.0
    %352 = vmatpush2.msra.mxu0 0.0
    %353 = vmatprep.subr.mxu0 0.0
    %354 = vmatpush2.msra.mxu0 0.0
    %355 = vmatprep.subr.mxu0 0.0
    %356 = vmatpush2.msra.mxu0 0.0
    %357 = vmatprep.subr.mxu0 0.0
    %358 = vmatpush2.msra.mxu0 0.0
    %359 = vmatprep.mubr.f32.mxu0 0.0
    %360 = vmatmul.mubr.f32.gmra.mxu0 %v290
    %v361 = vpop.f32.mrf.mxu0
    %v362 = vadd.f32 %v287, %v361
    %v363 = vpop.f32.mrf.mxu0
    %364 = vmatprep.mubr.f32.mxu0 0.0
    %365 = vmatmul.mubr.f32.gmra.mxu0 %v293
    %v366 = vpop.f32.mrf.mxu0
    %v367 = vadd.f32 %v287, %v366
    %v368 = vpop.f32.mrf.mxu0
    %369 = vdwg.mxu0
    %v370 = vmax.f32 %v362, 0.0
    %v371 = vmax.f32 %v367, 0.0
    %372 = vmatprep.subr.mxu0 0.0
    %373 = vmatpush1.msra.mxu0 0.0
    %374 = vmatprep.subr.mxu0 0.0
    %375 = vmatpush1.msra.mxu0 0.0
    %376 = vmatprep.subr.mxu0 0.0
    %377 = vmatpush1.msra.mxu0 0.0
    %378 = vmatprep.subr.mxu0 0.0
    %379 = vmatpush1.msra.mxu0 0.0
    %380 = vmatprep.subr.mxu0 0.0
    %381 = vmatpush1.msra.mxu0 0.0
    %382 = vmatprep.subr.mxu0 0.0
    %383 = vmatpush1.msra.mxu0 0.0
    %384 = vmatprep.subr.mxu0 0.0
    %385 = vmatpush1.msra.mxu0 0.0
    %386 = vmatprep.subr.mxu0 0.0
    %387 = vmatpush1.msra.mxu0 0.0
    %388 = vmatprep.subr.mxu0 0.0
    %389 = vmatpush1.msra.mxu0 0.0
    %390 = vmatprep.subr.mxu0 0.0
    %391 = vmatpush1.msra.mxu0 0.0
    %392 = vmatprep.subr.mxu0 0.0
    %393 = vmatpush1.msra.mxu0 0.0
    %394 = vmatprep.subr.mxu0 0.0
    %395 = vmatpush1.msra.mxu0 0.0
    %396 = vmatprep.subr.mxu0 0.0
    %397 = vmatpush1.msra.mxu0 0.0
    %398 = vmatprep.subr.mxu0 0.0
    %399 = vmatpush1.msra.mxu0 0.0
    %400 = vmatprep.subr.mxu0 0.0
    %401 = vmatpush1.msra.mxu0 %v371
    %402 = vmatprep.subr.mxu0 0.0
    %403 = vmatpush1.msra.mxu0 %v370
    %404 = vmatprep.subr.mxu0 0.0
    %405 = vmatpush2.msra.mxu0 0.0
    %406 = vmatprep.subr.mxu0 0.0
    %407 = vmatpush2.msra.mxu0 0.0
    %408 = vmatprep.subr.mxu0 0.0
    %409 = vmatpush2.msra.mxu0 0.0
    %410 = vmatprep.subr.mxu0 0.0
    %411 = vmatpush2.msra.mxu0 0.0
    %412 = vmatprep.subr.mxu0 0.0
    %413 = vmatpush2.msra.mxu0 0.0
    %414 = vmatprep.subr.mxu0 0.0
    %415 = vmatpush2.msra.mxu0 0.0
    %416 = vmatprep.subr.mxu0 0.0
    %417 = vmatpush2.msra.mxu0 0.0
    %418 = vmatprep.subr.mxu0 0.0
    %419 = vmatpush2.msra.mxu0 0.0
    %420 = vmatprep.subr.mxu0 0.0
    %421 = vmatpush2.msra.mxu0 0.0
    %422 = vmatprep.subr.mxu0 0.0
    %423 = vmatpush2.msra.mxu0 0.0
    %424 = vmatprep.subr.mxu0 0.0
    %425 = vmatpush2.msra.mxu0 0.0
    %426 = vmatprep.subr.mxu0 0.0
    %427 = vmatpush2.msra.mxu0 0.0
    %428 = vmatprep.subr.mxu0 0.0
    %429 = vmatpush2.msra.mxu0 0.0
    %430 = vmatprep.subr.mxu0 0.0
    %431 = vmatpush2.msra.mxu0 0.0
    %432 = vmatprep.subr.mxu0 0.0
    %433 = vmatpush2.msra.mxu0 0.0
    %434 = vmatprep.subr.mxu0 0.0
    %435 = vmatpush2.msra.mxu0 0.0
    %436 = vmatprep.mubr.f32.mxu0 0.0
    %437 = vmatmul.mubr.f32.gmra.mxu0 %v42
    %v438 = vpop.f32.mrf.mxu0
    %v439 = vadd.f32 0.0, %v438
    %v440 = vpop.f32.mrf.mxu0
    %441 = vmatprep.mubr.f32.mxu0 0.0
    %442 = vmatmul.mubr.f32.gmra.mxu0 %v45
    %v443 = vpop.f32.mrf.mxu0
    %v444 = vadd.f32 0.0, %v443
    %v445 = vpop.f32.mrf.mxu0
    %446 = vdwg.mxu0
    %v447 = vlaneseq
    %v448 = vshrl.u32 %v447, 7
    %v449 = vsub.s32 2, %v448
    %v450 = vrot.slane %v39, %v449
    %v452 = vsel %vm288, %v439, 0
    %v455 = vsel %vm288, %v444, 0
    %457 = vmatprep.subr.mxu0 0.0
    %458 = vmatpush1.msra.mxu0 0.0
    %459 = vmatprep.subr.mxu0 0.0
    %460 = vmatpush1.msra.mxu0 0.0
    %461 = vmatprep.subr.mxu0 0.0
    %462 = vmatpush1.msra.mxu0 0.0
    %463 = vmatprep.subr.mxu0 0.0
    %464 = vmatpush1.msra.mxu0 0.0
    %465 = vmatprep.subr.mxu0 0.0
    %466 = vmatpush1.msra.mxu0 0.0
    %467 = vmatprep.subr.mxu0 0.0
    %468 = vmatpush1.msra.mxu0 0.0
    %469 = vmatprep.subr.mxu0 0.0
    %470 = vmatpush1.msra.mxu0 0.0
    %471 = vmatprep.subr.mxu0 0.0
    %472 = vmatpush1.msra.mxu0 0.0
    %473 = vmatprep.subr.mxu0 0.0
    %474 = vmatpush1.msra.mxu0 0.0
    %475 = vmatprep.subr.mxu0 0.0
    %476 = vmatpush1.msra.mxu0 0.0
    %477 = vmatprep.subr.mxu0 0.0
    %478 = vmatpush1.msra.mxu0 0.0
    %479 = vmatprep.subr.mxu0 0.0
    %480 = vmatpush1.msra.mxu0 0.0
    %481 = vmatprep.subr.mxu0 0.0
    %482 = vmatpush1.msra.mxu0 %v30
    %483 = vmatprep.subr.mxu0 0.0
    %484 = vmatpush1.msra.mxu0 %v29
    %485 = vmatprep.subr.mxu0 0.0
    %486 = vmatpush1.msra.mxu0 %v28
    %487 = vmatprep.subr.mxu0 0.0
    %488 = vmatpush1.msra.mxu0 %v27
    %489 = vmatprep.subr.mxu0 0.0
    %490 = vmatpush2.msra.mxu0 0.0
    %491 = vmatprep.subr.mxu0 0.0
    %492 = vmatpush2.msra.mxu0 0.0
    %493 = vmatprep.subr.mxu0 0.0
    %494 = vmatpush2.msra.mxu0 0.0
    %495 = vmatprep.subr.mxu0 0.0
    %496 = vmatpush2.msra.mxu0 0.0
    %497 = vmatprep.subr.mxu0 0.0
    %498 = vmatpush2.msra.mxu0 0.0
    %499 = vmatprep.subr.mxu0 0.0
    %500 = vmatpush2.msra.mxu0 0.0
    %501 = vmatprep.subr.mxu0 0.0
    %502 = vmatpush2.msra.mxu0 0.0
    %503 = vmatprep.subr.mxu0 0.0
    %504 = vmatpush2.msra.mxu0 0.0
    %505 = vmatprep.subr.mxu0 0.0
    %506 = vmatpush2.msra.mxu0 0.0
    %507 = vmatprep.subr.mxu0 0.0
    %508 = vmatpush2.msra.mxu0 0.0
    %509 = vmatprep.subr.mxu0 0.0
    %510 = vmatpush2.msra.mxu0 0.0
    %511 = vmatprep.subr.mxu0 0.0
    %512 = vmatpush2.msra.mxu0 0.0
    %513 = vmatprep.subr.mxu0 0.0
    %514 = vmatpush2.msra.mxu0 0.0
    %515 = vmatprep.subr.mxu0 0.0
    %516 = vmatpush2.msra.mxu0 0.0
    %517 = vmatprep.subr.mxu0 0.0
    %518 = vmatpush2.msra.mxu0 0.0
    %519 = vmatprep.subr.mxu0 0.0
    %520 = vmatpush2.msra.mxu0 0.0
    %521 = vmatprep.mubr.f32.mxu0 0.0
    %522 = vmatmul.mubr.f32.gmra.mxu0 %v452
    %v523 = vpop.f32.mrf.mxu0
    %v524 = vadd.f32 %v450, %v523
    %v525 = vpop.f32.mrf.mxu0
    %526 = vmatprep.mubr.f32.mxu0 0.0
    %527 = vmatmul.mubr.f32.gmra.mxu0 %v455
    %v528 = vpop.f32.mrf.mxu0
    %v529 = vadd.f32 %v450, %v528
    %v530 = vpop.f32.mrf.mxu0
    %531 = vdwg.mxu0
    %v532 = vmax.f32 %v524, 0.0
    %v533 = vmax.f32 %v529, 0.0
    %v534 = vlaneseq
    %v535 = vshrl.u32 %v534, 7
    %v536 = vlaneseq
    %v537 = vand.u32 %v536, 127
    %v538 = vmul.u32 %v535, 8
    %vm539 = vcmp.ge.s32.totalorder %v537, %v538
    %v540 = vadd.s32 %v538, 8
    %vm541 = vcmp.lt.s32.totalorder %v537, %v540
    %vm542 = vmand %vm539, %vm541
    %v543 = vsel %vm542, 1, 0
    %v544 = vcvt.s32.f32 %v543
    %v546 = vsel %vm40, %v544, 0
    %548 = vmatprep.subr.mxu0 0.0
    %549 = vmatpush1.msra.mxu0 0.0
    %550 = vmatprep.subr.mxu0 0.0
    %551 = vmatpush1.msra.mxu0 0.0
    %552 = vmatprep.subr.mxu0 0.0
    %553 = vmatpush1.msra.mxu0 0.0
    %554 = vmatprep.subr.mxu0 0.0
    %555 = vmatpush1.msra.mxu0 0.0
    %556 = vmatprep.subr.mxu0 0.0
    %557 = vmatpush1.msra.mxu0 0.0
    %558 = vmatprep.subr.mxu0 0.0
    %559 = vmatpush1.msra.mxu0 0.0
    %560 = vmatprep.subr.mxu0 0.0
    %561 = vmatpush1.msra.mxu0 0.0
    %562 = vmatprep.subr.mxu0 0.0
    %563 = vmatpush1.msra.mxu0 0.0
    %564 = vmatprep.subr.mxu0 0.0
    %565 = vmatpush1.msra.mxu0 0.0
    %566 = vmatprep.subr.mxu0 0.0
    %567 = vmatpush1.msra.mxu0 0.0
    %568 = vmatprep.subr.mxu0 0.0
    %569 = vmatpush1.msra.mxu0 0.0
    %570 = vmatprep.subr.mxu0 0.0
    %571 = vmatpush1.msra.mxu0 0.0
    %572 = vmatprep.subr.mxu0 0.0
    %573 = vmatpush1.msra.mxu0 0.0
    %574 = vmatprep.subr.mxu0 0.0
    %575 = vmatpush1.msra.mxu0 0.0
    %576 = vmatprep.subr.mxu0 0.0
    %577 = vmatpush1.msra.mxu0 %v533
    %578 = vmatprep.subr.mxu0 0.0
    %579 = vmatpush1.msra.mxu0 %v532
    %580 = vmatprep.subr.mxu0 0.0
    %581 = vmatpush2.msra.mxu0 0.0
    %582 = vmatprep.subr.mxu0 0.0
    %583 = vmatpush2.msra.mxu0 0.0
    %584 = vmatprep.subr.mxu0 0.0
    %585 = vmatpush2.msra.mxu0 0.0
    %586 = vmatprep.subr.mxu0 0.0
    %587 = vmatpush2.msra.mxu0 0.0
    %588 = vmatprep.subr.mxu0 0.0
    %589 = vmatpush2.msra.mxu0 0.0
    %590 = vmatprep.subr.mxu0 0.0
    %591 = vmatpush2.msra.mxu0 0.0
    %592 = vmatprep.subr.mxu0 0.0
    %593 = vmatpush2.msra.mxu0 0.0
    %594 = vmatprep.subr.mxu0 0.0
    %595 = vmatpush2.msra.mxu0 0.0
    %596 = vmatprep.subr.mxu0 0.0
    %597 = vmatpush2.msra.mxu0 0.0
    %598 = vmatprep.subr.mxu0 0.0
    %599 = vmatpush2.msra.mxu0 0.0
    %600 = vmatprep.subr.mxu0 0.0
    %601 = vmatpush2.msra.mxu0 0.0
    %602 = vmatprep.subr.mxu0 0.0
    %603 = vmatpush2.msra.mxu0 0.0
    %604 = vmatprep.subr.mxu0 0.0
    %605 = vmatpush2.msra.mxu0 0.0
    %606 = vmatprep.subr.mxu0 0.0
    %607 = vmatpush2.msra.mxu0 0.0
    %608 = vmatprep.subr.mxu0 0.0
    %609 = vmatpush2.msra.mxu0 0.0
    %610 = vmatprep.subr.mxu0 0.0
    %611 = vmatpush2.msra.mxu0 0.0
    %612 = vmatprep.mubr.f32.mxu0 0.0
    %613 = vmatmul.mubr.f32.gmra.mxu0 %v546
    %v614 = vpop.f32.mrf.mxu0
    %v615 = vadd.f32 0.0, %v614
    %v616 = vpop.f32.mrf.mxu0
    %617 = vdwg.mxu0
    %v618 = vlaneseq
    %v619 = vshrl.u32 %v618, 7
    %v620 = vsub.s32 3, %v619
    %v621 = vrot.slane %v39, %v620
    %v623 = vsel %vm288, %v615, 0
    %625 = vmatprep.subr.mxu0 0.0
    %626 = vmatpush1.msra.mxu0 0.0
    %627 = vmatprep.subr.mxu0 0.0
    %628 = vmatpush1.msra.mxu0 0.0
    %629 = vmatprep.subr.mxu0 0.0
    %630 = vmatpush1.msra.mxu0 0.0
    %631 = vmatprep.subr.mxu0 0.0
    %632 = vmatpush1.msra.mxu0 0.0
    %633 = vmatprep.subr.mxu0 0.0
    %634 = vmatpush1.msra.mxu0 0.0
    %635 = vmatprep.subr.mxu0 0.0
    %636 = vmatpush1.msra.mxu0 0.0
    %637 = vmatprep.subr.mxu0 0.0
    %638 = vmatpush1.msra.mxu0 0.0
    %639 = vmatprep.subr.mxu0 0.0
    %640 = vmatpush1.msra.mxu0 0.0
    %641 = vmatprep.subr.mxu0 0.0
    %642 = vmatpush1.msra.mxu0 0.0
    %643 = vmatprep.subr.mxu0 0.0
    %644 = vmatpush1.msra.mxu0 0.0
    %645 = vmatprep.subr.mxu0 0.0
    %646 = vmatpush1.msra.mxu0 0.0
    %647 = vmatprep.subr.mxu0 0.0
    %648 = vmatpush1.msra.mxu0 0.0
    %649 = vmatprep.subr.mxu0 0.0
    %650 = vmatpush1.msra.mxu0 %v34
    %651 = vmatprep.subr.mxu0 0.0
    %652 = vmatpush1.msra.mxu0 %v33
    %653 = vmatprep.subr.mxu0 0.0
    %654 = vmatpush1.msra.mxu0 %v32
    %655 = vmatprep.subr.mxu0 0.0
    %656 = vmatpush1.msra.mxu0 %v31
    %657 = vmatprep.subr.mxu0 0.0
    %658 = vmatpush2.msra.mxu0 0.0
    %659 = vmatprep.subr.mxu0 0.0
    %660 = vmatpush2.msra.mxu0 0.0
    %661 = vmatprep.subr.mxu0 0.0
    %662 = vmatpush2.msra.mxu0 0.0
    %663 = vmatprep.subr.mxu0 0.0
    %664 = vmatpush2.msra.mxu0 0.0
    %665 = vmatprep.subr.mxu0 0.0
    %666 = vmatpush2.msra.mxu0 0.0
    %667 = vmatprep.subr.mxu0 0.0
    %668 = vmatpush2.msra.mxu0 0.0
    %669 = vmatprep.subr.mxu0 0.0
    %670 = vmatpush2.msra.mxu0 0.0
    %671 = vmatprep.subr.mxu0 0.0
    %672 = vmatpush2.msra.mxu0 0.0
    %673 = vmatprep.subr.mxu0 0.0
    %674 = vmatpush2.msra.mxu0 0.0
    %675 = vmatprep.subr.mxu0 0.0
    %676 = vmatpush2.msra.mxu0 0.0
    %677 = vmatprep.subr.mxu0 0.0
    %678 = vmatpush2.msra.mxu0 0.0
    %679 = vmatprep.subr.mxu0 0.0
    %680 = vmatpush2.msra.mxu0 0.0
    %681 = vmatprep.subr.mxu0 0.0
    %682 = vmatpush2.msra.mxu0 0.0
    %683 = vmatprep.subr.mxu0 0.0
    %684 = vmatpush2.msra.mxu0 0.0
    %685 = vmatprep.subr.mxu0 0.0
    %686 = vmatpush2.msra.mxu0 0.0
    %687 = vmatprep.subr.mxu0 0.0
    %688 = vmatpush2.msra.mxu0 0.0
    %689 = vmatprep.mubr.f32.mxu0 0.0
    %690 = vmatmul.mubr.f32.gmra.mxu0 %v623
    %v691 = vpop.f32.mrf.mxu0
    %v692 = vadd.f32 %v621, %v691
    %v693 = vpop.f32.mrf.mxu0
    %694 = vdwg.mxu0
    %v695 = vmax.f32 %v692, 0.0
    %v696 = vlaneseq
    %v697 = vshrl.u32 %v696, 7
    %v698 = vsub.s32 4, %v697
    %v699 = vrot.slane %v39, %v698
    %v701 = vsel %vm288, %v695, 0
    %703 = vmatprep.subr.mxu0 0.0
    %704 = vmatpush1.msra.mxu0 0.0
    %705 = vmatprep.subr.mxu0 0.0
    %706 = vmatpush1.msra.mxu0 0.0
    %707 = vmatprep.subr.mxu0 0.0
    %708 = vmatpush1.msra.mxu0 0.0
    %709 = vmatprep.subr.mxu0 0.0
    %710 = vmatpush1.msra.mxu0 0.0
    %711 = vmatprep.subr.mxu0 0.0
    %712 = vmatpush1.msra.mxu0 0.0
    %713 = vmatprep.subr.mxu0 0.0
    %714 = vmatpush1.msra.mxu0 0.0
    %715 = vmatprep.subr.mxu0 0.0
    %716 = vmatpush1.msra.mxu0 0.0
    %717 = vmatprep.subr.mxu0 0.0
    %718 = vmatpush1.msra.mxu0 0.0
    %719 = vmatprep.subr.mxu0 0.0
    %720 = vmatpush1.msra.mxu0 0.0
    %721 = vmatprep.subr.mxu0 0.0
    %722 = vmatpush1.msra.mxu0 0.0
    %723 = vmatprep.subr.mxu0 0.0
    %724 = vmatpush1.msra.mxu0 0.0
    %725 = vmatprep.subr.mxu0 0.0
    %726 = vmatpush1.msra.mxu0 0.0
    %727 = vmatprep.subr.mxu0 0.0
    %728 = vmatpush1.msra.mxu0 %v38
    %729 = vmatprep.subr.mxu0 0.0
    %730 = vmatpush1.msra.mxu0 %v37
    %731 = vmatprep.subr.mxu0 0.0
    %732 = vmatpush1.msra.mxu0 %v36
    %733 = vmatprep.subr.mxu0 0.0
    %734 = vmatpush1.msra.mxu0 %v35
    %735 = vmatprep.subr.mxu0 0.0
    %736 = vmatpush2.msra.mxu0 0.0
    %737 = vmatprep.subr.mxu0 0.0
    %738 = vmatpush2.msra.mxu0 0.0
    %739 = vmatprep.subr.mxu0 0.0
    %740 = vmatpush2.msra.mxu0 0.0
    %741 = vmatprep.subr.mxu0 0.0
    %742 = vmatpush2.msra.mxu0 0.0
    %743 = vmatprep.subr.mxu0 0.0
    %744 = vmatpush2.msra.mxu0 0.0
    %745 = vmatprep.subr.mxu0 0.0
    %746 = vmatpush2.msra.mxu0 0.0
    %747 = vmatprep.subr.mxu0 0.0
    %748 = vmatpush2.msra.mxu0 0.0
    %749 = vmatprep.subr.mxu0 0.0
    %750 = vmatpush2.msra.mxu0 0.0
    %751 = vmatprep.subr.mxu0 0.0
    %752 = vmatpush2.msra.mxu0 0.0
    %753 = vmatprep.subr.mxu0 0.0
    %754 = vmatpush2.msra.mxu0 0.0
    %755 = vmatprep.subr.mxu0 0.0
    %756 = vmatpush2.msra.mxu0 0.0
    %757 = vmatprep.subr.mxu0 0.0
    %758 = vmatpush2.msra.mxu0 0.0
    %759 = vmatprep.subr.mxu0 0.0
    %760 = vmatpush2.msra.mxu0 0.0
    %761 = vmatprep.subr.mxu0 0.0
    %762 = vmatpush2.msra.mxu0 0.0
    %763 = vmatprep.subr.mxu0 0.0
    %764 = vmatpush2.msra.mxu0 0.0
    %765 = vmatprep.subr.mxu0 0.0
    %766 = vmatpush2.msra.mxu0 0.0
    %767 = vmatprep.mubr.f32.mxu0 0.0
    %768 = vmatmul.mubr.f32.gmra.mxu0 %v701
    %v769 = vpop.f32.mrf.mxu0
    %v770 = vadd.f32 %v699, %v769
    %v771 = vpop.f32.mrf.mxu0
    %772 = vdwg.mxu0
    %v773 = vxor.u32 %v770, 2147483648
    %v774 = vmul.f32 %v773, 1.442695
    %v775 = vpow.pop %v774
    %v776 = vadd.f32 %v775, 1.0
    %v777 = vrcp.pop %v776
    %v778 = vmul.f32 1.0, %v777
    %vm779 = vcmask 254976
    %780 = vst.msk [vmem:[#allocation2] sm:$0x3] %vm779, %v695
    %vm781 = vcmask 1024
    %782 = vst.msk [vmem:[%s3] sm:$0x3] %vm781, %v778
    // Predicated region
    $region14: #{tpu_custom_call.1} parent=1 // pred_check
      _
    $region15: #{tpu_custom_call.1} parent=1 // pred_check_branch
      %784 = sbr.rel (0) target = $region17
    $region16: #{tpu_custom_call.1} parent=1 // pred_region
      _
    $region17: #{tpu_custom_call.1} parent=1 // pred_fallthru
      _
    // Predicated region
    $region18: #{tpu_custom_call.1} parent=1 // pred_check
      _
    $region19: #{tpu_custom_call.1} parent=1 // pred_check_branch
      %786 = sbr.rel (0) target = $region21
    $region20: #{tpu_custom_call.1} parent=1 // pred_region
      %s788 = ssub.s32 32, 32
      %789 = vsyncadd [#allocation3], %s788
      %s791 = sshll.u32 [#allocation2], 4
      %s792 = int_to_ptr.vmem [resolvable:$true] %s791
      %794 = dma.vmem_to_hbm [thread:$0]  %s792, 32, %s4, [#allocation3]
    $region21: #{tpu_custom_call.1} parent=1 // pred_fallthru
      _
    // Predicated region
    $region22: #{tpu_custom_call.1} parent=1 // pred_check
      _
    $region23: #{tpu_custom_call.1} parent=1 // pred_check_branch
      %796 = sbr.rel (0) target = $region25
    $region24: #{tpu_custom_call.1} parent=1 // pred_region
      _
    $region25: #{tpu_custom_call.1} parent=1 // pred_fallthru
      _
    // Predicated region
    $region26: #{tpu_custom_call.1} parent=1 // pred_check
      _
    $region27: #{tpu_custom_call.1} parent=1 // pred_check_branch
      %798 = sbr.rel (0) target = $region29
    $region28: #{tpu_custom_call.1} parent=1 // pred_region
      %799 = dma.done [#allocation3], 32
    $region29: #{tpu_custom_call.1} parent=1 // pred_fallthru
      _
    %800 = vsyncpa [#allocation3], 1

</llo_original>
